<compile_context>
chip_gen: v6e
topology: v6e:2x2x1
jax: 0.10.0
libtpu: 0.0.40
codegen_flags: <defaults>
</compile_context>

<pallas_src>
import jax
import jax.numpy as jnp
from jax.experimental import pallas as pl
from jax.experimental.pallas import tpu as pltpu


def _round_up(n, m):
    return ((n + m - 1) // m) * m


def _select_tile_b(batch):
    """Rows per grid step.

    * batch <= 256: single grid step covering the whole (8-row-rounded) batch —
      this kernel is latency/overhead bound at RL batch sizes, so splitting only
      adds per-step overhead.
    * batch  > 256: split into >= 2 roughly equal tiles (so v7x's two TensorCores
      both get work via dimension_semantics=("parallel",)), each tile <= ~1024
      rows (a few hundred KB of VMEM per step, far below every generation's
      limit) to amortize the ~0.35us/step grid overhead.
    """
    b8 = _round_up(max(batch, 1), 8)
    if b8 <= 256:
        return b8
    n_tiles = max(2, pl.cdiv(b8, 1024))
    return _round_up(pl.cdiv(b8, n_tiles), 8)


def ddpg_actor_kernel(x_ref, w0_ref, b0_ref, w1_ref, b1_ref, w2_ref, b2_ref, o_ref):
    # fc0 + relu : f32 matmul (K = state_dim is tiny; keeps input precision).
    h = jnp.dot(x_ref[...], w0_ref[...], preferred_element_type=jnp.float32)
    h = jnp.maximum(h + b0_ref[...], 0.0)
    # fc1 + relu : bf16 MXU operands, f32 accumulation; elementwise stays f32
    # (v5e has no bf16 VPU path).
    h = jnp.dot(h.astype(jnp.bfloat16), w1_ref[...], preferred_element_type=jnp.float32)
    h = jnp.maximum(h + b1_ref[...], 0.0)
    # fc2 + tanh : computed only on the real action_dim columns (no lane padding),
    # so the EUP tanh and the HBM writeback touch real data only.
    h = jnp.dot(h.astype(jnp.bfloat16), w2_ref[...], preferred_element_type=jnp.float32)
    o_ref[...] = jnp.tanh(h + b2_ref[...]).astype(o_ref.dtype)


def prepare_params(params):
    """One-time parameter prep (hoisted out of the per-step forward):
    w1/w2 cast to bf16 for the MXU, biases reshaped to (1, out) rows, w0 kept f32."""
    def as_row(b):
        return jnp.asarray(b, jnp.float32).reshape(1, -1)

    return {
        "w0": jnp.asarray(params["w0"], jnp.float32),
        "b0": as_row(params["b0"]),
        "w1": jnp.asarray(params["w1"], jnp.bfloat16),
        "b1": as_row(params["b1"]),
        "w2": jnp.asarray(params["w2"], jnp.bfloat16),
        "b2": as_row(params["b2"]),
    }


def ddpg_actor_forward(x, prepared):
    """x: (batch, state_dim) float32.  prepared: output of prepare_params()."""
    w0, b0, w1, b1, w2, b2 = (prepared[k] for k in ("w0", "b0", "w1", "b1", "w2", "b2"))
    batch, state_dim = x.shape
    h0 = w0.shape[1]          # 128
    h1 = w1.shape[1]          # 64
    action_dim = w2.shape[1]

    # --- adaptive batch tiling (the only padding in this kernel) ---------------
    tile_b = _select_tile_b(batch)
    grid_b = pl.cdiv(batch, tile_b)
    b_pad = grid_b * tile_b
    x_p = jnp.pad(x, ((0, b_pad - batch), (0, 0))) if b_pad != batch else x

    def resident(a):  # whole-array block, same index every step -> stays in VMEM
        return pl.BlockSpec(a.shape, lambda i: (0, 0))

    # Cost estimate from REAL (unpadded) dims.
    flops = 2 * batch * (state_dim * h0 + h0 * h1 + h1 * action_dim)
    bytes_accessed = (
        x.size * 4
        + w0.size * 4 + w1.size * 2 + w2.size * 2
        + (b0.size + b1.size + b2.size) * 4
        + batch * action_dim * 4
    )

    out = pl.pallas_call(
        ddpg_actor_kernel,
        out_shape=jax.ShapeDtypeStruct((b_pad, action_dim), jnp.float32),
        grid=(grid_b,),
        in_specs=[
            pl.BlockSpec((tile_b, state_dim), lambda i: (i, 0)),   # x: tiled over batch
            resident(w0), resident(b0),
            resident(w1), resident(b1),
            resident(w2), resident(b2),
        ],
        out_specs=pl.BlockSpec((tile_b, action_dim), lambda i: (i, 0)),
        compiler_params=pltpu.CompilerParams(
            dimension_semantics=("parallel",),
        ),
        cost_estimate=pl.CostEstimate(
            flops=flops,
            transcendentals=batch * action_dim,     # tanh
            bytes_accessed=bytes_accessed,
        ),
    )(x_p, w0, b0, w1, b1, w2, b2)

    return out[:batch] if b_pad != batch else out


def init_params(key, state_dim, action_dim):
    """Deterministic init mimicking PyTorch nn.Linear default (uniform +-1/sqrt(fan_in))."""
    def linear(k, fan_in, fan_out):
        kw, kb = jax.random.split(k)
        bound = 1.0 / jnp.sqrt(jnp.float32(fan_in))
        w = jax.random.uniform(kw, (fan_in, fan_out), jnp.float32, -bound, bound)
        b = jax.random.uniform(kb, (1, fan_out), jnp.float32, -bound, bound)
        return w, b

    k0, k1, k2 = jax.random.split(key, 3)
    w0, b0 = linear(k0, state_dim, 128)
    w1, b1 = linear(k1, 128, 64)
    w2, b2 = linear(k2, 64, action_dim)
    return {"w0": w0, "b0": b0, "w1": w1, "b1": b1, "w2": w2, "b2": b2}


def reference_forward(x, p):
    h = jnp.maximum(x @ p["w0"] + p["b0"], 0.0)
    h = jnp.maximum(h @ p["w1"] + p["b1"], 0.0)
    return jnp.tanh(h @ p["w2"] + p["b2"])


if __name__ == "__main__":
    key = jax.random.PRNGKey(0)
    kx, kp = jax.random.split(key)

    batch, state_dim, action_dim = 8, 16, 8
    x = jax.random.normal(kx, (batch, state_dim), dtype=jnp.float32)
    params = init_params(kp, state_dim, action_dim)
    prepared = prepare_params(params)          # hoisted one-time weight prep

    out = ddpg_actor_forward(x, prepared)
    out = jax.block_until_ready(out)

    ref = reference_forward(x, params)         # pure f32 reference
    assert out.shape == (batch, action_dim)
    # fc0 is f32; only the bf16 hidden activations / weights introduce error.
    assert jnp.allclose(out, ref, atol=3e-2, rtol=3e-2), "mismatch vs reference"

    print("KERNEL_OK")
</pallas_src>

<mosaic_0001>
module attributes {stable_mosaic.version = 11 : i64} {
  func.func @ddpg_actor_kernel(%arg0: i32, %arg1: memref<8x16xf32, #tpu.memory_space<vmem>>, %arg2: memref<16x128xf32, #tpu.memory_space<vmem>>, %arg3: memref<1x128xf32, #tpu.memory_space<vmem>>, %arg4: memref<128x64xbf16, #tpu.memory_space<vmem>>, %arg5: memref<1x64xf32, #tpu.memory_space<vmem>>, %arg6: memref<64x8xbf16, #tpu.memory_space<vmem>>, %arg7: memref<1x8xf32, #tpu.memory_space<vmem>>, %arg8: memref<8x8xf32, #tpu.memory_space<vmem>>) attributes {dimension_semantics = [#tpu.dimension_semantics<parallel>], iteration_bounds = array<i64: 1>, scalar_prefetch = 0 : i64, scratch_operands = 0 : i64, tpu.core_type = #tpu.core_type<tc>, window_params = [{transform_indices = @transform_0, window_bounds = array<i64: 8, 16>}, {pipeline_mode = #tpu.pipeline_mode<synchronous>, transform_indices = @transform_1, window_bounds = array<i64: 16, 128>}, {pipeline_mode = #tpu.pipeline_mode<synchronous>, transform_indices = @transform_2, window_bounds = array<i64: 1, 128>}, {pipeline_mode = #tpu.pipeline_mode<synchronous>, transform_indices = @transform_3, window_bounds = array<i64: 128, 64>}, {pipeline_mode = #tpu.pipeline_mode<synchronous>, transform_indices = @transform_4, window_bounds = array<i64: 1, 64>}, {pipeline_mode = #tpu.pipeline_mode<synchronous>, transform_indices = @transform_5, window_bounds = array<i64: 64, 8>}, {pipeline_mode = #tpu.pipeline_mode<synchronous>, transform_indices = @transform_6, window_bounds = array<i64: 1, 8>}, {transform_indices = @transform_7, window_bounds = array<i64: 8, 8>}]} {
    %c0 = arith.constant 0 : index
    %c0_0 = arith.constant 0 : index
    %0 = vector.load %arg1[%c0, %c0_0] : memref<8x16xf32, #tpu.memory_space<vmem>>, vector<8x16xf32>
    %c0_1 = arith.constant 0 : index
    %c0_2 = arith.constant 0 : index
    %1 = vector.load %arg2[%c0_1, %c0_2] : memref<16x128xf32, #tpu.memory_space<vmem>>, vector<16x128xf32>
    %cst = arith.constant dense<0.000000e+00> : vector<8x128xf32>
    %2 = tpu.matmul %0, %1, %cst {dimension_numbers = #tpu.dot_dimension_numbers<[1], [0], [0], [1], [0, 0, 1, 1], [], []>} : vector<8x16xf32>, vector<16x128xf32>, vector<8x128xf32> -> vector<8x128xf32>
    %c0_3 = arith.constant 0 : index
    %c0_4 = arith.constant 0 : index
    %3 = vector.load %arg3[%c0_3, %c0_4] : memref<1x128xf32, #tpu.memory_space<vmem>>, vector<1x128xf32>
    %4 = vector.broadcast %3 : vector<1x128xf32> to vector<8x128xf32>
    %5 = arith.addf %2, %4 : vector<8x128xf32>
    %cst_5 = arith.constant 0.000000e+00 : f32
    %6 = vector.broadcast %cst_5 : f32 to vector<8x128xf32>
    %7 = arith.maximumf %5, %6 : vector<8x128xf32>
    %8 = arith.truncf %7 : vector<8x128xf32> to vector<8x128xbf16>
    %c0_6 = arith.constant 0 : index
    %c0_7 = arith.constant 0 : index
    %9 = vector.load %arg4[%c0_6, %c0_7] : memref<128x64xbf16, #tpu.memory_space<vmem>>, vector<128x64xbf16>
    %cst_8 = arith.constant dense<0.000000e+00> : vector<8x64xf32>
    %10 = tpu.matmul %8, %9, %cst_8 {dimension_numbers = #tpu.dot_dimension_numbers<[1], [0], [0], [1], [0, 0, 1, 1], [], []>} : vector<8x128xbf16>, vector<128x64xbf16>, vector<8x64xf32> -> vector<8x64xf32>
    %c0_9 = arith.constant 0 : index
    %c0_10 = arith.constant 0 : index
    %11 = vector.load %arg5[%c0_9, %c0_10] : memref<1x64xf32, #tpu.memory_space<vmem>>, vector<1x64xf32>
    %12 = vector.broadcast %11 : vector<1x64xf32> to vector<8x64xf32>
    %13 = arith.addf %10, %12 : vector<8x64xf32>
    %cst_11 = arith.constant 0.000000e+00 : f32
    %14 = vector.broadcast %cst_11 : f32 to vector<8x64xf32>
    %15 = arith.maximumf %13, %14 : vector<8x64xf32>
    %16 = arith.truncf %15 : vector<8x64xf32> to vector<8x64xbf16>
    %c0_12 = arith.constant 0 : index
    %c0_13 = arith.constant 0 : index
    %17 = vector.load %arg6[%c0_12, %c0_13] : memref<64x8xbf16, #tpu.memory_space<vmem>>, vector<64x8xbf16>
    %cst_14 = arith.constant dense<0.000000e+00> : vector<8x8xf32>
    %18 = tpu.matmul %16, %17, %cst_14 {dimension_numbers = #tpu.dot_dimension_numbers<[1], [0], [0], [1], [0, 0, 1, 1], [], []>} : vector<8x64xbf16>, vector<64x8xbf16>, vector<8x8xf32> -> vector<8x8xf32>
    %c0_15 = arith.constant 0 : index
    %c0_16 = arith.constant 0 : index
    %19 = vector.load %arg7[%c0_15, %c0_16] : memref<1x8xf32, #tpu.memory_space<vmem>>, vector<1x8xf32>
    %20 = vector.broadcast %19 : vector<1x8xf32> to vector<8x8xf32>
    %21 = arith.addf %18, %20 : vector<8x8xf32>
    %22 = math.tanh %21 : vector<8x8xf32>
    %c0_17 = arith.constant 0 : index
    %c0_18 = arith.constant 0 : index
    %23 = vector.load %arg8[%c0_17, %c0_18] : memref<8x8xf32, #tpu.memory_space<vmem>>, vector<8x8xf32>
    tpu.vector_store %arg8[%c0_17, %c0_18], %22 {strides = array<i32>} : memref<8x8xf32, #tpu.memory_space<vmem>>, vector<8x8xf32>,
    return
  }
  func.func @transform_0(%arg0: i32) -> (i32, i32) {
    %c0_i32 = arith.constant 0 : i32
    %c0_i32_0 = arith.constant 0 : i32
    return %arg0, %c0_i32 : i32, i32
  }
  func.func @transform_1(%arg0: i32) -> (i32, i32) {
    %c0_i32 = arith.constant 0 : i32
    %c0_i32_0 = arith.constant 0 : i32
    %c0_i32_1 = arith.constant 0 : i32
    return %c0_i32, %c0_i32_0 : i32, i32
  }
  func.func @transform_2(%arg0: i32) -> (i32, i32) {
    %c0_i32 = arith.constant 0 : i32
    %c0_i32_0 = arith.constant 0 : i32
    %c0_i32_1 = arith.constant 0 : i32
    return %c0_i32, %c0_i32_0 : i32, i32
  }
  func.func @transform_3(%arg0: i32) -> (i32, i32) {
    %c0_i32 = arith.constant 0 : i32
    %c0_i32_0 = arith.constant 0 : i32
    %c0_i32_1 = arith.constant 0 : i32
    return %c0_i32, %c0_i32_0 : i32, i32
  }
  func.func @transform_4(%arg0: i32) -> (i32, i32) {
    %c0_i32 = arith.constant 0 : i32
    %c0_i32_0 = arith.constant 0 : i32
    %c0_i32_1 = arith.constant 0 : i32
    return %c0_i32, %c0_i32_0 : i32, i32
  }
  func.func @transform_5(%arg0: i32) -> (i32, i32) {
    %c0_i32 = arith.constant 0 : i32
    %c0_i32_0 = arith.constant 0 : i32
    %c0_i32_1 = arith.constant 0 : i32
    return %c0_i32, %c0_i32_0 : i32, i32
  }
  func.func @transform_6(%arg0: i32) -> (i32, i32) {
    %c0_i32 = arith.constant 0 : i32
    %c0_i32_0 = arith.constant 0 : i32
    %c0_i32_1 = arith.constant 0 : i32
    return %c0_i32, %c0_i32_0 : i32, i32
  }
  func.func @transform_7(%arg0: i32) -> (i32, i32) {
    %c0_i32 = arith.constant 0 : i32
    %c0_i32_0 = arith.constant 0 : i32
    return %arg0, %c0_i32 : i32, i32
  }
}

</mosaic_0001>

<llo_original>
// kernel: tpu_custom_call.1
$region0: #{tpu_custom_call.1}
  #allocation0 [shape = 'u32[]', space=smem, size = 0x4, offset = 0x4, fixed_abs, tag = 'smem constant byte address 0x4 - core index']
  #allocation1 [shape = 'u32[144,128]{1,0:T(1,128)}', space=vmem, size = 0x12000, scoped, tag = 'internal scratch']
  %s0 = inlined_call_operand.vmem [shape: f32[8,16], index: 0, kind: input, shape index: {}]
  %s1 = inlined_call_operand.vmem [shape: f32[16,128], index: 1, kind: input, shape index: {}]
  %s2 = inlined_call_operand.vmem [shape: f32[1,128], index: 2, kind: input, shape index: {}]
  %s3 = inlined_call_operand.vmem [shape: bf16[128,64], index: 3, kind: input, shape index: {}]
  %s4 = inlined_call_operand.vmem [shape: f32[1,64], index: 4, kind: input, shape index: {}]
  %s5 = inlined_call_operand.vmem [shape: bf16[64,8], index: 5, kind: input, shape index: {}]
  %s6 = inlined_call_operand.vmem [shape: f32[1,8], index: 6, kind: input, shape index: {}]
  %s7 = inlined_call_operand.hbm [shape: f32[8,8], index: 7, kind: output, shape index: {}]
  %s8 = sld [smem:[#allocation0]]
  $region38: #{tpu_custom_call.1} parent=0
    _
  %s10 = ssub.s32 1, %s8
  %s11 = scalar_select 0, %s10, %s8
  $region1: #{tpu_custom_call.1} parent=0
    #allocation2 [shape = 'u8[4096]{0}', space=vmem, size = 0x1000, scoped, tag = 'output window, operand 0, single buffered']
    #allocation3 [shape = 's32[1]{0}', space=sflag, size = 0x4, scoped, tag = 'scoped memory for tpu_custom_call.1']
    %12 = vsyncpa [#allocation3], 0
    // Predicated region
    $region2: #{tpu_custom_call.1} parent=1 // pred_check
      _
    $region3: #{tpu_custom_call.1} parent=1 // pred_check_branch
      %14 = sbr.rel (0) target = $region5
    $region4: #{tpu_custom_call.1} parent=1 // pred_region
      _
    $region5: #{tpu_custom_call.1} parent=1 // pred_fallthru
      _
    // Predicated region
    $region6: #{tpu_custom_call.1} parent=1 // pred_check
      _
    $region7: #{tpu_custom_call.1} parent=1 // pred_check_branch
      %16 = sbr.rel (0) target = $region9
    $region8: #{tpu_custom_call.1} parent=1 // pred_region
      _
    $region9: #{tpu_custom_call.1} parent=1 // pred_fallthru
      _
    // Predicated region
    $region10: #{tpu_custom_call.1} parent=1 // pred_check
      _
    $region11: #{tpu_custom_call.1} parent=1 // pred_check_branch
      %18 = sbr.rel (0) target = $region13
    $region12: #{tpu_custom_call.1} parent=1 // pred_region
      _
    $region13: #{tpu_custom_call.1} parent=1 // pred_fallthru
      _
    // Predicated region
    $region14: #{tpu_custom_call.1} parent=1 // pred_check
      _
    $region15: #{tpu_custom_call.1} parent=1 // pred_check_branch
      %20 = sbr.rel (0) target = $region17
    $region16: #{tpu_custom_call.1} parent=1 // pred_region
      _
    $region17: #{tpu_custom_call.1} parent=1 // pred_fallthru
      _
    // Predicated region
    $region18: #{tpu_custom_call.1} parent=1 // pred_check
      _
    $region19: #{tpu_custom_call.1} parent=1 // pred_check_branch
      %22 = sbr.rel (0) target = $region21
    $region20: #{tpu_custom_call.1} parent=1 // pred_region
      _
    $region21: #{tpu_custom_call.1} parent=1 // pred_fallthru
      _
    // Predicated region
    $region22: #{tpu_custom_call.1} parent=1 // pred_check
      _
    $region23: #{tpu_custom_call.1} parent=1 // pred_check_branch
      %24 = sbr.rel (0) target = $region25
    $region24: #{tpu_custom_call.1} parent=1 // pred_region
      _
    $region25: #{tpu_custom_call.1} parent=1 // pred_fallthru
      _
    // Predicated region
    $region26: #{tpu_custom_call.1} parent=1 // pred_check
      _
    $region27: #{tpu_custom_call.1} parent=1 // pred_check_branch
      %26 = sbr.rel (0) target = $region29
    $region28: #{tpu_custom_call.1} parent=1 // pred_region
      _
    $region29: #{tpu_custom_call.1} parent=1 // pred_fallthru
      _
    %v28 = vld [vmem:[%s0] sm:$0xff]
    %v29 = vld [vmem:[%s1] sm:$0xff]
    %v30 = vld [vmem:[%s1 + $0x8] sm:$0xff]
    %v31 = vld [vmem:[%s2] sm:$0x1]
    %v33 = vlaneseq
    %v34 = vshrl.u32 %v33, 7
    %v35 = vsub.s32 0, %v34
    %v36 = vrot.slane %v31, %v35
    %vm38 = vcmask 130048
    %v40 = vsel %vm38, %v28, 0
    %42 = vmatprep.subr.mxu0 0.0
    %43 = vmatpush1.msra.mxu0 0.0
    %44 = vmatprep.subr.mxu0 0.0
    %45 = vmatpush1.msra.mxu0 0.0
    %46 = vmatprep.subr.mxu0 0.0
    %47 = vmatpush1.msra.mxu0 0.0
    %48 = vmatprep.subr.mxu0 0.0
    %49 = vmatpush1.msra.mxu0 0.0
    %50 = vmatprep.subr.mxu0 0.0
    %51 = vmatpush1.msra.mxu0 0.0
    %52 = vmatprep.subr.mxu0 0.0
    %53 = vmatpush1.msra.mxu0 0.0
    %54 = vmatprep.subr.mxu0 0.0
    %55 = vmatpush1.msra.mxu0 0.0
    %56 = vmatprep.subr.mxu0 0.0
    %57 = vmatpush1.msra.mxu0 0.0
    %58 = vmatprep.subr.mxu0 0.0
    %59 = vmatpush1.msra.mxu0 0.0
    %60 = vmatprep.subr.mxu0 0.0
    %61 = vmatpush1.msra.mxu0 0.0
    %62 = vmatprep.subr.mxu0 0.0
    %63 = vmatpush1.msra.mxu0 0.0
    %64 = vmatprep.subr.mxu0 0.0
    %65 = vmatpush1.msra.mxu0 0.0
    %66 = vmatprep.subr.mxu0 0.0
    %67 = vmatpush1.msra.mxu0 0.0
    %68 = vmatprep.subr.mxu0 0.0
    %69 = vmatpush1.msra.mxu0 0.0
    %70 = vmatprep.subr.mxu0 0.0
    %71 = vmatpush1.msra.mxu0 %v30
    %72 = vmatprep.subr.mxu0 0.0
    %73 = vmatpush1.msra.mxu0 %v29
    %74 = vmatprep.subr.mxu0 0.0
    %75 = vmatpush2.msra.mxu0 0.0
    %76 = vmatprep.subr.mxu0 0.0
    %77 = vmatpush2.msra.mxu0 0.0
    %78 = vmatprep.subr.mxu0 0.0
    %79 = vmatpush2.msra.mxu0 0.0
    %80 = vmatprep.subr.mxu0 0.0
    %81 = vmatpush2.msra.mxu0 0.0
    %82 = vmatprep.subr.mxu0 0.0
    %83 = vmatpush2.msra.mxu0 0.0
    %84 = vmatprep.subr.mxu0 0.0
    %85 = vmatpush2.msra.mxu0 0.0
    %86 = vmatprep.subr.mxu0 0.0
    %87 = vmatpush2.msra.mxu0 0.0
    %88 = vmatprep.subr.mxu0 0.0
    %89 = vmatpush2.msra.mxu0 0.0
    %90 = vmatprep.subr.mxu0 0.0
    %91 = vmatpush2.msra.mxu0 0.0
    %92 = vmatprep.subr.mxu0 0.0
    %93 = vmatpush2.msra.mxu0 0.0
    %94 = vmatprep.subr.mxu0 0.0
    %95 = vmatpush2.msra.mxu0 0.0
    %96 = vmatprep.subr.mxu0 0.0
    %97 = vmatpush2.msra.mxu0 0.0
    %98 = vmatprep.subr.mxu0 0.0
    %99 = vmatpush2.msra.mxu0 0.0
    %100 = vmatprep.subr.mxu0 0.0
    %101 = vmatpush2.msra.mxu0 0.0
    %102 = vmatprep.subr.mxu0 0.0
    %103 = vmatpush2.msra.mxu0 0.0
    %104 = vmatprep.subr.mxu0 0.0
    %105 = vmatpush2.msra.mxu0 0.0
    %106 = vmatprep.mubr.f32.mxu0 0.0
    %107 = vmatmul.mubr.f32.gmra.mxu0 %v40
    %v108 = vpop.f32.mrf.mxu0
    %v109 = vadd.f32 %v36, %v108
    %v110 = vpop.f32.mrf.mxu0
    %111 = vdwg.mxu0
    %v112 = vmax.f32 %v109, 0.0
    %v113 = vpack.c.bf16 %v112, %v112
    %v114 = vld [vmem:[%s3] sm:$0xf]
    %v115 = vld [vmem:[%s3 + $0x4] sm:$0xf]
    %v116 = vld [vmem:[%s3 + $0x8] sm:$0xf]
    %v117 = vld [vmem:[%s3 + $0xc] sm:$0xf]
    %v118 = vld [vmem:[%s3 + $0x10] sm:$0xf]
    %v119 = vld [vmem:[%s3 + $0x14] sm:$0xf]
    %v120 = vld [vmem:[%s3 + $0x18] sm:$0xf]
    %v121 = vld [vmem:[%s3 + $0x1c] sm:$0xf]
    %v122 = vld [vmem:[%s3 + $0x20] sm:$0xf]
    %v123 = vld [vmem:[%s3 + $0x24] sm:$0xf]
    %v124 = vld [vmem:[%s3 + $0x28] sm:$0xf]
    %v125 = vld [vmem:[%s3 + $0x2c] sm:$0xf]
    %v126 = vld [vmem:[%s3 + $0x30] sm:$0xf]
    %v127 = vld [vmem:[%s3 + $0x34] sm:$0xf]
    %v128 = vld [vmem:[%s3 + $0x38] sm:$0xf]
    %v129 = vld [vmem:[%s3 + $0x3c] sm:$0xf]
    %v130 = vld [vmem:[%s4] sm:$0x1]
    %v132 = vlaneseq
    %v133 = vshrl.u32 %v132, 7
    %v134 = vsub.s32 0, %v133
    %v135 = vrot.slane %v130, %v134
    %v153 = vunpack.c.l.b16 %v114
    %v154 = vunpack.c.l.b16 %v115
    %v155 = vunpack.c.l.b16 %v116
    %v156 = vunpack.c.l.b16 %v117
    %v157 = vunpack.c.l.b16 %v118
    %v158 = vunpack.c.l.b16 %v119
    %v159 = vunpack.c.l.b16 %v120
    %v160 = vunpack.c.l.b16 %v121
    %v161 = vunpack.c.l.b16 %v122
    %v162 = vunpack.c.l.b16 %v123
    %v163 = vunpack.c.l.b16 %v124
    %v164 = vunpack.c.l.b16 %v125
    %v165 = vunpack.c.l.b16 %v126
    %v166 = vunpack.c.l.b16 %v127
    %v167 = vunpack.c.l.b16 %v128
    %v168 = vunpack.c.l.b16 %v129
    %v169 = vpack.c.b16 %v154, %v153
    %v170 = vpack.c.b16 %v156, %v155
    %v171 = vpack.c.b16 %v158, %v157
    %v172 = vpack.c.b16 %v160, %v159
    %v173 = vpack.c.b16 %v162, %v161
    %v174 = vpack.c.b16 %v164, %v163
    %v175 = vpack.c.b16 %v166, %v165
    %v176 = vpack.c.b16 %v168, %v167
    %185 = vmatprep.subr.bf16.mxu0 0
    %186 = vmatpush1.bf16.msra.mxu0 %v176
    %187 = vmatprep.subr.bf16.mxu0 0
    %188 = vmatpush1.bf16.msra.mxu0 %v175
    %189 = vmatprep.subr.bf16.mxu0 0
    %190 = vmatpush1.bf16.msra.mxu0 %v174
    %191 = vmatprep.subr.bf16.mxu0 0
    %192 = vmatpush1.bf16.msra.mxu0 %v173
    %193 = vmatprep.subr.bf16.mxu0 0
    %194 = vmatpush1.bf16.msra.mxu0 %v172
    %195 = vmatprep.subr.bf16.mxu0 0
    %196 = vmatpush1.bf16.msra.mxu0 %v171
    %197 = vmatprep.subr.bf16.mxu0 0
    %198 = vmatpush1.bf16.msra.mxu0 %v170
    %199 = vmatprep.subr.bf16.mxu0 0
    %200 = vmatpush1.bf16.msra.mxu0 %v169
    %201 = vmatprep.subr.bf16.mxu0 0
    %202 = vmatpush2.bf16.msra.mxu0 0
    %203 = vmatprep.subr.bf16.mxu0 0
    %204 = vmatpush2.bf16.msra.mxu0 0
    %205 = vmatprep.subr.bf16.mxu0 0
    %206 = vmatpush2.bf16.msra.mxu0 0
    %207 = vmatprep.subr.bf16.mxu0 0
    %208 = vmatpush2.bf16.msra.mxu0 0
    %209 = vmatprep.subr.bf16.mxu0 0
    %210 = vmatpush2.bf16.msra.mxu0 0
    %211 = vmatprep.subr.bf16.mxu0 0
    %212 = vmatpush2.bf16.msra.mxu0 0
    %213 = vmatprep.subr.bf16.mxu0 0
    %214 = vmatpush2.bf16.msra.mxu0 0
    %215 = vmatprep.subr.bf16.mxu0 0
    %216 = vmatpush2.bf16.msra.mxu0 0
    %217 = vmatprep.mubr.bf16.mxu0 0
    %218 = vmatmul.mubr.bf16.gmra.mxu0 %v113
    %v219 = vpop.f32.mrf.mxu0
    %v220 = vadd.f32 %v135, %v219
    %v221 = vpop.f32.mrf.mxu0
    %v222 = vpop.f32.mrf.mxu0
    %v223 = vpop.f32.mrf.mxu0
    %224 = vdwg.mxu0
    %v225 = vmax.f32 %v220, 0.0
    %v226 = vpack.c.bf16 %v225, %v225
    %v227 = vld [vmem:[%s5] sm:$0xf]
    %v228 = vld [vmem:[%s5 + $0x4] sm:$0xf]
    %v229 = vld [vmem:[%s5 + $0x8] sm:$0xf]
    %v230 = vld [vmem:[%s5 + $0xc] sm:$0xf]
    %v231 = vld [vmem:[%s5 + $0x10] sm:$0xf]
    %v232 = vld [vmem:[%s5 + $0x14] sm:$0xf]
    %v233 = vld [vmem:[%s5 + $0x18] sm:$0xf]
    %v234 = vld [vmem:[%s5 + $0x1c] sm:$0xf]
    %v235 = vld [vmem:[%s6] sm:$0x1]
    %v237 = vlaneseq
    %v238 = vshrl.u32 %v237, 7
    %v239 = vsub.s32 0, %v238
    %v240 = vrot.slane %v235, %v239
    %v250 = vunpack.c.l.b16 %v227
    %v251 = vunpack.c.l.b16 %v228
    %v252 = vunpack.c.l.b16 %v229
    %v253 = vunpack.c.l.b16 %v230
    %v254 = vunpack.c.l.b16 %v231
    %v255 = vunpack.c.l.b16 %v232
    %v256 = vunpack.c.l.b16 %v233
    %v257 = vunpack.c.l.b16 %v234
    %v258 = vpack.c.b16 %v251, %v250
    %v259 = vpack.c.b16 %v253, %v252
    %v260 = vpack.c.b16 %v255, %v254
    %v261 = vpack.c.b16 %v257, %v256
    %vm266 = vcmask 523264
    %v268 = vsel %vm266, %v226, 0
    %270 = vmatprep.subr.bf16.mxu0 0
    %271 = vmatpush1.bf16.msra.mxu0 0
    %272 = vmatprep.subr.bf16.mxu0 0
    %273 = vmatpush1.bf16.msra.mxu0 0
    %274 = vmatprep.subr.bf16.mxu0 0
    %275 = vmatpush1.bf16.msra.mxu0 0
    %276 = vmatprep.subr.bf16.mxu0 0
    %277 = vmatpush1.bf16.msra.mxu0 0
    %278 = vmatprep.subr.bf16.mxu0 0
    %279 = vmatpush1.bf16.msra.mxu0 %v261
    %280 = vmatprep.subr.bf16.mxu0 0
    %281 = vmatpush1.bf16.msra.mxu0 %v260
    %282 = vmatprep.subr.bf16.mxu0 0
    %283 = vmatpush1.bf16.msra.mxu0 %v259
    %284 = vmatprep.subr.bf16.mxu0 0
    %285 = vmatpush1.bf16.msra.mxu0 %v258
    %286 = vmatprep.subr.bf16.mxu0 0
    %287 = vmatpush2.bf16.msra.mxu0 0
    %288 = vmatprep.subr.bf16.mxu0 0
    %289 = vmatpush2.bf16.msra.mxu0 0
    %290 = vmatprep.subr.bf16.mxu0 0
    %291 = vmatpush2.bf16.msra.mxu0 0
    %292 = vmatprep.subr.bf16.mxu0 0
    %293 = vmatpush2.bf16.msra.mxu0 0
    %294 = vmatprep.subr.bf16.mxu0 0
    %295 = vmatpush2.bf16.msra.mxu0 0
    %296 = vmatprep.subr.bf16.mxu0 0
    %297 = vmatpush2.bf16.msra.mxu0 0
    %298 = vmatprep.subr.bf16.mxu0 0
    %299 = vmatpush2.bf16.msra.mxu0 0
    %300 = vmatprep.subr.bf16.mxu0 0
    %301 = vmatpush2.bf16.msra.mxu0 0
    %302 = vmatprep.mubr.bf16.mxu0 0
    %303 = vmatmul.mubr.bf16.gmra.mxu0 %v268
    %v304 = vpop.f32.mrf.mxu0
    %v305 = vadd.f32 %v240, %v304
    %v306 = vpop.f32.mrf.mxu0
    %v307 = vpop.f32.mrf.mxu0
    %v308 = vpop.f32.mrf.mxu0
    %309 = vdwg.mxu0
    %v310 = vtanh.pop %v305
    %vm311 = vcmask 64512
    %312 = vst.msk [vmem:[#allocation2] sm:$0xff] %vm311, %v310
    // Predicated region
    $region30: #{tpu_custom_call.1} parent=1 // pred_check
      _
    $region31: #{tpu_custom_call.1} parent=1 // pred_check_branch
      %314 = sbr.rel (0) target = $region33
    $region32: #{tpu_custom_call.1} parent=1 // pred_region
      %s316 = ssub.s32 128, 128
      %317 = vsyncadd [#allocation3], %s316
      %s319 = sshll.u32 [#allocation2], 4
      %s320 = int_to_ptr.vmem [resolvable:$true] %s319
      %322 = dma.vmem_to_hbm [thread:$0]  %s320, 128, %s7, [#allocation3]
    $region33: #{tpu_custom_call.1} parent=1 // pred_fallthru
      _
    // Predicated region
    $region34: #{tpu_custom_call.1} parent=1 // pred_check
      _
    $region35: #{tpu_custom_call.1} parent=1 // pred_check_branch
      %324 = sbr.rel (0) target = $region37
    $region36: #{tpu_custom_call.1} parent=1 // pred_region
      %325 = dma.done [#allocation3], 128
    $region37: #{tpu_custom_call.1} parent=1 // pred_fallthru
      _
    %326 = vsyncpa [#allocation3], 1

</llo_original>
